<compile_context>
chip_gen: v5e
topology: v5e:2x2
jax: 0.10.0
libtpu: 0.0.40
codegen_flags: <defaults>
</compile_context>

<pallas_src>
import numpy as np
import jax
import jax.numpy as jnp
from jax.experimental import pallas as pl
from jax.experimental.pallas import tpu as pltpu


def _make_tv_kernel(H, W, tb, P):
    HW = H * W
    ragged = (P % tb) != 0          # last block extends past the real planes
    fold8 = (tb % 8) == 0           # can we fold rows into sublane groups?

    def fold(sq):
        # (tb, X) f32 -> per-block partial using only elementwise (VALU) adds.
        if fold8:
            g = tb // 8
            if g == 1:
                return sq                                     # (8, X)
            return sq.reshape(g, 8, sq.shape[-1]).sum(axis=0)  # (8, X)
        # tiny-P fallback (tb == P < 8 or odd): single sublane reduce
        return jnp.sum(sq, axis=0, keepdims=True)             # (1, X)

    def kernel(wmask_ref, x_ref, h_ref, w_ref):
        x = x_ref[...].astype(jnp.float32)                    # (tb, HW)

        if ragged:
            # Zero garbage rows of the boundary block so they contribute 0 to
            # both sums (all diffs are within a row of this view).
            valid = P - pl.program_id(0) * tb
            row = jax.lax.broadcasted_iota(jnp.int32, (tb, 1), 0)
            x = jnp.where(row < valid, x, 0.0)

        # Vertical neighbours: flat indices i and i+W are always inside the
        # same plane for i < H*W - W, so no mask is needed.
        dh = x[:, W:] - x[:, : HW - W]
        h_ref[...] = fold(dh * dh)

        # Horizontal neighbours: i and i+1, invalid when i is the last column
        # of an image row.  Mask is a precomputed (1, HW-1) f32 input.
        dw = x[:, 1:] - x[:, : HW - 1]
        w_ref[...] = fold(dw * dw * wmask_ref[...])

    return kernel


def tv_loss_pallas(x, tvloss_weight=0.1):
    """TV loss matching the PyTorch `tv_loss` module forward pass.

    x: (B, C, H, W) array. Returns a scalar float32.
    """
    B, C, H, W = x.shape
    assert H > 1 and W > 1, "TV loss needs H >= 2 and W >= 2"
    P = B * C
    HW = H * W
    xf = x.reshape(P, HW)                      # free view: one plane per row

    # ---- block sizing: big (multi-MiB) blocks, 8-aligned, no padding -------
    bytes_per_plane = HW * x.dtype.itemsize
    target_block_bytes = 4 * 1024 * 1024
    tb = int(target_block_bytes // bytes_per_plane)
    tb = max(8, (tb // 8) * 8)                 # sublane-aligned, >= 8 planes
    if tb >= P:
        tb = P                                 # full extent -> always legal
    if tb == P and P >= 16:
        # v7x has 2 TensorCores: make sure the parallel grid has >= 2 blocks.
        tb = (((P + 1) // 2) + 7) // 8 * 8
    # TODO(synk): planes larger than the block budget still load >= 8 whole
    # planes per block; intra-plane (row-group + halo) tiling would be needed
    # for multi-MiB planes.
    num_blocks = pl.cdiv(P, tb)
    R = 8 if tb % 8 == 0 else 1
    X_h = HW - W
    X_w = HW - 1

    # Horizontal-validity mask: 1.0 except at the last column of each row.
    col = np.arange(X_w) % W
    wmask = jnp.asarray((col != (W - 1)).astype(np.float32).reshape(1, X_w))

    blk_in = tb * HW * x.dtype.itemsize
    blk_f32 = tb * HW * 4
    # Double-buffered input + generous f32 temporaries, capped well under the
    # 64 MiB physical VMEM of v7x (v5e/v6e have 128 MiB).
    vmem_limit = int(min(48 * 1024 * 1024,
                         max(32 * 1024 * 1024, 2 * blk_in + 8 * blk_f32)))

    h_part, w_part = pl.pallas_call(
        _make_tv_kernel(H, W, tb, P),
        out_shape=(
            jax.ShapeDtypeStruct((num_blocks, R, X_h), jnp.float32),
            jax.ShapeDtypeStruct((num_blocks, R, X_w), jnp.float32),
        ),
        grid_spec=pltpu.PrefetchScalarGridSpec(
            num_scalar_prefetch=0,
            grid=(num_blocks,),
            in_specs=[
                pl.BlockSpec((1, X_w), lambda i: (0, 0)),     # mask (resident)
                pl.BlockSpec((tb, HW), lambda i: (i, 0)),     # plane block
            ],
            out_specs=(
                pl.BlockSpec((None, R, X_h), lambda i: (i, 0, 0)),
                pl.BlockSpec((None, R, X_w), lambda i: (i, 0, 0)),
            ),
        ),
        compiler_params=pltpu.CompilerParams(
            dimension_semantics=("parallel",),   # independent blocks -> 2 TCs
            vmem_limit_bytes=vmem_limit,
        ),
    )(wmask, xf)

    # Tiny final reduction + normalization (matches the PyTorch reference).
    h_tv = jnp.sum(h_part)
    w_tv = jnp.sum(w_part)
    count_h = jnp.float32(C * (H - 1) * W)
    count_w = jnp.float32(C * H * (W - 1))
    tv = 2.0 * (h_tv / count_h + w_tv / count_w)
    return jnp.float32(tvloss_weight) * tv / jnp.float32(B)


def tv_loss_ref(x, tvloss_weight=0.1):
    # pure-JAX reference for correctness checking
    B, C, H, W = x.shape
    xf = x.astype(jnp.float32)
    h_tv = jnp.sum((xf[:, :, 1:, :] - xf[:, :, : H - 1, :]) ** 2)
    w_tv = jnp.sum((xf[:, :, :, 1:] - xf[:, :, :, : W - 1]) ** 2)
    count_h = C * (H - 1) * W
    count_w = C * H * (W - 1)
    return tvloss_weight * 2.0 * (h_tv / count_h + w_tv / count_w) / B


if __name__ == "__main__":
    key = jax.random.PRNGKey(0)
    x = jax.random.normal(key, (2, 4, 16, 16), dtype=jnp.float32)

    out = tv_loss_pallas(x, tvloss_weight=0.1)
    out = jax.block_until_ready(out)

    ref = tv_loss_ref(x, tvloss_weight=0.1)
    assert jnp.allclose(out, ref, rtol=1e-5, atol=1e-6), (out, ref)

    print("KERNEL_OK")
</pallas_src>

<mosaic_0001>
module attributes {stable_mosaic.version = 11 : i64} {
  func.func @kernel(%arg0: i32, %arg1: memref<1x255xf32, #tpu.memory_space<vmem>>, %arg2: memref<8x256xf32, #tpu.memory_space<vmem>>, %arg3: memref<1x8x240xf32, #tpu.memory_space<vmem>>, %arg4: memref<1x8x255xf32, #tpu.memory_space<vmem>>) attributes {dimension_semantics = [#tpu.dimension_semantics<parallel>], iteration_bounds = array<i64: 1>, scalar_prefetch = 0 : i64, scratch_operands = 0 : i64, tpu.core_type = #tpu.core_type<tc>, window_params = [{pipeline_mode = #tpu.pipeline_mode<synchronous>, transform_indices = @transform_0, window_bounds = array<i64: 1, 255>}, {transform_indices = @transform_1, window_bounds = array<i64: 8, 256>}, {transform_indices = @transform_2, window_bounds = array<i64: 1, 8, 240>}, {transform_indices = @transform_3, window_bounds = array<i64: 1, 8, 255>}]} {
    %c0 = arith.constant 0 : index
    %c0_0 = arith.constant 0 : index
    %0 = vector.load %arg2[%c0, %c0_0] : memref<8x256xf32, #tpu.memory_space<vmem>>, vector<8x256xf32>
    %1 = vector.extract_strided_slice %0 {offsets = [0, 16], sizes = [8, 240], strides = [1, 1]} : vector<8x256xf32> to vector<8x240xf32>
    %2 = vector.extract_strided_slice %0 {offsets = [0, 0], sizes = [8, 240], strides = [1, 1]} : vector<8x256xf32> to vector<8x240xf32>
    %3 = arith.subf %1, %2 : vector<8x240xf32>
    %4 = arith.mulf %3, %3 : vector<8x240xf32>
    %c0_1 = arith.constant 0 : index
    %c0_2 = arith.constant 0 : index
    %c0_3 = arith.constant 0 : index
    %5 = vector.load %arg3[%c0_1, %c0_2, %c0_3] : memref<1x8x240xf32, #tpu.memory_space<vmem>>, vector<1x8x240xf32>
    %6 = vector.shape_cast %5 : vector<1x8x240xf32> to vector<8x240xf32>
    %7 = vector.shape_cast %4 : vector<8x240xf32> to vector<1x8x240xf32>
    tpu.vector_store %arg3[%c0_1, %c0_2, %c0_3], %7 {strides = array<i32>} : memref<1x8x240xf32, #tpu.memory_space<vmem>>, vector<1x8x240xf32>,
    %8 = vector.extract_strided_slice %0 {offsets = [0, 1], sizes = [8, 255], strides = [1, 1]} : vector<8x256xf32> to vector<8x255xf32>
    %9 = vector.extract_strided_slice %0 {offsets = [0, 0], sizes = [8, 255], strides = [1, 1]} : vector<8x256xf32> to vector<8x255xf32>
    %10 = arith.subf %8, %9 : vector<8x255xf32>
    %11 = arith.mulf %10, %10 : vector<8x255xf32>
    %c0_4 = arith.constant 0 : index
    %c0_5 = arith.constant 0 : index
    %12 = vector.load %arg1[%c0_4, %c0_5] : memref<1x255xf32, #tpu.memory_space<vmem>>, vector<1x255xf32>
    %13 = vector.broadcast %12 : vector<1x255xf32> to vector<8x255xf32>
    %14 = arith.mulf %11, %13 : vector<8x255xf32>
    %c0_6 = arith.constant 0 : index
    %c0_7 = arith.constant 0 : index
    %c0_8 = arith.constant 0 : index
    %15 = vector.load %arg4[%c0_6, %c0_7, %c0_8] : memref<1x8x255xf32, #tpu.memory_space<vmem>>, vector<1x8x255xf32>
    %16 = vector.shape_cast %15 : vector<1x8x255xf32> to vector<8x255xf32>
    %17 = vector.shape_cast %14 : vector<8x255xf32> to vector<1x8x255xf32>
    tpu.vector_store %arg4[%c0_6, %c0_7, %c0_8], %17 {strides = array<i32>} : memref<1x8x255xf32, #tpu.memory_space<vmem>>, vector<1x8x255xf32>,
    return
  }
  func.func @transform_0(%arg0: i32) -> (i32, i32) {
    %c0_i32 = arith.constant 0 : i32
    %c0_i32_0 = arith.constant 0 : i32
    %c0_i32_1 = arith.constant 0 : i32
    return %c0_i32, %c0_i32_0 : i32, i32
  }
  func.func @transform_1(%arg0: i32) -> (i32, i32) {
    %c0_i32 = arith.constant 0 : i32
    %c0_i32_0 = arith.constant 0 : i32
    return %arg0, %c0_i32 : i32, i32
  }
  func.func @transform_2(%arg0: i32) -> (i32, i32, i32) {
    %c0_i32 = arith.constant 0 : i32
    %c0_i32_0 = arith.constant 0 : i32
    %c0_i32_1 = arith.constant 0 : i32
    return %arg0, %c0_i32, %c0_i32_0 : i32, i32, i32
  }
  func.func @transform_3(%arg0: i32) -> (i32, i32, i32) {
    %c0_i32 = arith.constant 0 : i32
    %c0_i32_0 = arith.constant 0 : i32
    %c0_i32_1 = arith.constant 0 : i32
    return %arg0, %c0_i32, %c0_i32_0 : i32, i32, i32
  }
}

</mosaic_0001>

<llo_original>
// kernel: tpu_custom_call.1
$region0: #{tpu_custom_call.1}
  #allocation0 [shape = 'u32[]', space=smem, size = 0x4, offset = 0x4, fixed_abs, tag = 'smem constant byte address 0x4 - core index']
  #allocation1 [shape = 'u32[72,128]{1,0:T(1,128)}', space=vmem, size = 0x9000, scoped, tag = 'internal scratch']
  %s0 = inlined_call_operand.hbm [shape: f32[1,255], index: 0, kind: input, shape index: {}]
  %s1 = inlined_call_operand.hbm [shape: f32[8,256], index: 1, kind: input, shape index: {}]
  %s2 = inlined_call_operand.hbm [shape: f32[1,8,240], index: 2, kind: output, shape index: {0}]
  %s3 = inlined_call_operand.hbm [shape: f32[1,8,255], index: 3, kind: output, shape index: {1}]
  %4 = xla_tuple %s2, %s3
  %s5 = sld [smem:[#allocation0]]
  $region34: #{tpu_custom_call.1} parent=0
    _
  %s7 = ssub.s32 1, %s5
  %s8 = scalar_select 0, %s7, %s5
  $region1: #{tpu_custom_call.1} parent=0
    #allocation2 [shape = 'u8[1024]{0}', space=vmem, size = 0x400, scoped, tag = 'input window, operand 0, single buffered']
    #allocation3 [shape = 's32[1]{0}', space=sflag, size = 0x4, scoped, tag = 'scoped memory for tpu_custom_call.1']
    #allocation4 [shape = 's32[1]{0}', space=sflag, size = 0x4, scoped, tag = 'scoped memory for tpu_custom_call.1']
    #allocation5 [shape = 'u8[8192]{0}', space=vmem, size = 0x2000, scoped, tag = 'input window, operand 1, single buffered']
    #allocation6 [shape = 's32[1]{0}', space=sflag, size = 0x4, scoped, tag = 'scoped memory for tpu_custom_call.1']
    #allocation7 [shape = 'u8[8192]{0}', space=vmem, size = 0x2000, scoped, tag = 'output window, operand 0, single buffered']
    #allocation8 [shape = 'u8[8192]{0}', space=vmem, size = 0x2000, scoped, tag = 'output window, operand 1, single buffered']
    #allocation9 [shape = 's32[1]{0}', space=sflag, size = 0x4, scoped, tag = 'scoped memory for tpu_custom_call.1']
    %9 = vsyncpa [#allocation3], 0
    %10 = vsyncpa [#allocation6], 0
    %11 = vsyncpa [#allocation4], 0
    %12 = vsyncpa [#allocation9], 0
    // Predicated region
    $region2: #{tpu_custom_call.1} parent=1 // pred_check
      _
    $region3: #{tpu_custom_call.1} parent=1 // pred_check_branch
      %14 = sbr.rel (0) target = $region5
    $region4: #{tpu_custom_call.1} parent=1 // pred_region
      %16 = vsyncadd [#allocation3], 0
      %s18 = sshll.u32 %s0, 4
      %s19 = int_to_ptr.hbm [resolvable:$true] %s18
      %s20 = sshll.u32 [#allocation2], 4
      %s21 = int_to_ptr.vmem [resolvable:$true] %s20
      %23 = dma.hbm_to_vmem [thread:$0]  %s19, 32, %s21, [#allocation3]
    $region5: #{tpu_custom_call.1} parent=1 // pred_fallthru
      _
    // Predicated region
    $region6: #{tpu_custom_call.1} parent=1 // pred_check
      _
    $region7: #{tpu_custom_call.1} parent=1 // pred_check_branch
      %25 = sbr.rel (0) target = $region9
    $region8: #{tpu_custom_call.1} parent=1 // pred_region
      %27 = vsyncadd [#allocation6], 0
      %s29 = sshll.u32 %s1, 4
      %s30 = int_to_ptr.hbm [resolvable:$true] %s29
      %s31 = sshll.u32 [#allocation5], 4
      %s32 = int_to_ptr.vmem [resolvable:$true] %s31
      %34 = dma.hbm_to_vmem [thread:$0]  %s30, 256, %s32, [#allocation6]
    $region9: #{tpu_custom_call.1} parent=1 // pred_fallthru
      _
    // Predicated region
    $region10: #{tpu_custom_call.1} parent=1 // pred_check
      _
    $region11: #{tpu_custom_call.1} parent=1 // pred_check_branch
      %36 = sbr.rel (0) target = $region13
    $region12: #{tpu_custom_call.1} parent=1 // pred_region
      %38 = dma.done [#allocation3], 32
    $region13: #{tpu_custom_call.1} parent=1 // pred_fallthru
      _
    // Predicated region
    $region14: #{tpu_custom_call.1} parent=1 // pred_check
      _
    $region15: #{tpu_custom_call.1} parent=1 // pred_check_branch
      %40 = sbr.rel (0) target = $region17
    $region16: #{tpu_custom_call.1} parent=1 // pred_region
      %42 = dma.done [#allocation6], 256
    $region17: #{tpu_custom_call.1} parent=1 // pred_fallthru
      _
    %v43 = vld [vmem:[#allocation5] sm:$0xff]
    %v44 = vld [vmem:[#allocation5 + $0x8] sm:$0xff]
    %47 = vrot.lane.b32.xlu0 %v43, 16
    %v48 = vpop.permute.xlu0 %47
    %49 = vrot.lane.b32.xlu0 %v44, 16
    %v50 = vpop.permute.xlu0 %49
    %vm51 = vcmask 130048
    %v52 = vsel %vm51, %v48, %v50
    %v55 = vsub.f32 %v43, %v48
    %v56 = vsub.f32 %v44, %v52
    %v57 = vmul.f32 %v55, %v55
    %v58 = vmul.f32 %v56, %v56
    %61 = vrot.lane.b32.xlu0 %v57, 112
    %v62 = vpop.permute.xlu0 %61
    %63 = vrot.lane.b32.xlu0 %v58, 112
    %v64 = vpop.permute.xlu0 %63
    %vm65 = vcmask 916480
    %v66 = vsel %vm65, %v62, %v64
    %69 = vst [vmem:[#allocation7] sm:$0xff] %v66
    %70 = vst.msk [vmem:[#allocation7 + $0x8] sm:$0xff] %vm65, %v64
    %71 = vrot.lane.b32.xlu0 %v43, 1
    %v72 = vpop.permute.xlu0 %71
    %73 = vrot.lane.b32.xlu0 %v44, 1
    %v74 = vpop.permute.xlu0 %73
    %vm75 = vcmask 7168
    %v76 = vsel %vm75, %v72, %v74
    %v79 = vsub.f32 %v43, %v72
    %v80 = vsub.f32 %v44, %v76
    %v81 = vmul.f32 %v79, %v79
    %v82 = vmul.f32 %v80, %v80
    %v83 = vld [vmem:[#allocation2] sm:$0x3]
    %v85 = vperm.slane %v83, 0
    %v86 = vperm.slane %v83, 1
    %87 = vrot.lane.b32.xlu0 %v85, 1
    %v88 = vpop.permute.xlu0 %87
    %89 = vrot.lane.b32.xlu0 %v86, 1
    %v90 = vpop.permute.xlu0 %89
    %v91 = vsel %vm75, %v88, %v90
    %v94 = vmul.f32 %v81, %v88
    %v95 = vmul.f32 %v82, %v91
    %98 = vrot.lane.b32.xlu0 %v94, 127
    %v99 = vpop.permute.xlu0 %98
    %100 = vrot.lane.b32.xlu0 %v95, 127
    %v101 = vpop.permute.xlu0 %100
    %vm102 = vcmask 1039360
    %v103 = vsel %vm102, %v99, %v101
    %106 = vst [vmem:[#allocation8] sm:$0xff] %v103
    %107 = vst.msk [vmem:[#allocation8 + $0x8] sm:$0xff] %vm102, %v101
    // Predicated region
    $region18: #{tpu_custom_call.1} parent=1 // pred_check
      _
    $region19: #{tpu_custom_call.1} parent=1 // pred_check_branch
      %109 = sbr.rel (0) target = $region21
    $region20: #{tpu_custom_call.1} parent=1 // pred_region
      %111 = vsyncadd [#allocation4], 0
      %s113 = sshll.u32 [#allocation7], 4
      %s114 = int_to_ptr.vmem [resolvable:$true] %s113
      %s115 = sshll.u32 %s2, 4
      %s116 = int_to_ptr.hbm [resolvable:$true] %s115
      %118 = dma.vmem_to_hbm [thread:$0]  %s114, 256, %s116, [#allocation4]
    $region21: #{tpu_custom_call.1} parent=1 // pred_fallthru
      _
    // Predicated region
    $region22: #{tpu_custom_call.1} parent=1 // pred_check
      _
    $region23: #{tpu_custom_call.1} parent=1 // pred_check_branch
      %120 = sbr.rel (0) target = $region25
    $region24: #{tpu_custom_call.1} parent=1 // pred_region
      %122 = vsyncadd [#allocation9], 0
      %s124 = sshll.u32 [#allocation8], 4
      %s125 = int_to_ptr.vmem [resolvable:$true] %s124
      %s126 = sshll.u32 %s3, 4
      %s127 = int_to_ptr.hbm [resolvable:$true] %s126
      %129 = dma.vmem_to_hbm [thread:$0]  %s125, 256, %s127, [#allocation9]
    $region25: #{tpu_custom_call.1} parent=1 // pred_fallthru
      _
    // Predicated region
    $region26: #{tpu_custom_call.1} parent=1 // pred_check
      _
    $region27: #{tpu_custom_call.1} parent=1 // pred_check_branch
      %131 = sbr.rel (0) target = $region29
    $region28: #{tpu_custom_call.1} parent=1 // pred_region
      %133 = dma.done [#allocation4], 256
    $region29: #{tpu_custom_call.1} parent=1 // pred_fallthru
      _
    // Predicated region
    $region30: #{tpu_custom_call.1} parent=1 // pred_check
      _
    $region31: #{tpu_custom_call.1} parent=1 // pred_check_branch
      %135 = sbr.rel (0) target = $region33
    $region32: #{tpu_custom_call.1} parent=1 // pred_region
      %137 = dma.done [#allocation9], 256
    $region33: #{tpu_custom_call.1} parent=1 // pred_fallthru
      _
    %138 = vsyncpa [#allocation3], 1
    %139 = vsyncpa [#allocation6], 1
    %140 = vsyncpa [#allocation4], 1
    %141 = vsyncpa [#allocation9], 1

</llo_original>
